<compile_context>
chip_gen: v6e
topology: v6e:2x2x1
jax: 0.10.0
libtpu: 0.0.40
codegen_flags: <defaults>
</compile_context>

<pallas_src>
import jax
import jax.numpy as jnp
from jax import lax
from jax.experimental import pallas as pl
from jax.experimental.pallas import tpu as pltpu


_MXU_BATCH_THRESHOLD = 8   # above this, the O(B^2) VPU pairwise Gram loses to the MXU
_MXU_MAX_TK = 8192         # bounds the (tk, B) transposed RHS intermediate on the MXU path


def _vmem_capacity_bytes():
    """Physical VMEM per TensorCore (v5e/v6e: 128 MiB, v7x: 64 MiB)."""
    try:
        return int(pltpu.get_tpu_info().vmem_capacity_bytes)
    except Exception:
        return 64 * 1024 * 1024   # conservative (v7x-sized) fallback


def _make_kernel(B, T, F, ragged, use_mxu):
    """Build the kernel body (B, T, F, ragged, use_mxu are static Python values)."""

    def kernel(d1_ref, d2_ref, out_ref, gram_acc, n1_acc, n2_acc):
        k = pl.program_id(0)

        @pl.when(k == 0)
        def _():
            gram_acc[...] = jnp.zeros_like(gram_acc)
            n1_acc[...] = jnp.zeros_like(n1_acc)
            n2_acc[...] = jnp.zeros_like(n2_acc)

        d1 = d1_ref[...]          # (B, T), native dtype (f32 or bf16)
        d2 = d2_ref[...]          # (B, T)

        if ragged:
            # Last tile extends past F; Pallas leaves OOB lanes unspecified, so
            # zero them before they can touch the Gram or the norms.
            lane = lax.broadcasted_iota(jnp.int32, (1, T), 1) + k * T
            valid = lane < F
            d1 = jnp.where(valid, d1, jnp.zeros_like(d1))
            d2 = jnp.where(valid, d2, jnp.zeros_like(d2))

        d1f = d1.astype(jnp.float32)
        d2f = d2.astype(jnp.float32)

        # Row sum-of-squares partials.  The lane-axis reduce lowers to per-vreg
        # column VPU adds plus a single intra-vreg cross-lane finish per step,
        # so the XLU cost is O(1) vregs and hides under the DMA.
        n1_acc[...] += jnp.sum(d1f * d1f, axis=1, keepdims=True)
        n2_acc[...] += jnp.sum(d2f * d2f, axis=1, keepdims=True)

        if use_mxu:
            # Larger-B path: MXU matmul, contraction on the last dim of both
            # operands.  T is capped in the wrapper so the transposed (T, B)
            # intermediate Mosaic builds for the RHS stays small.
            gram_acc[...] += lax.dot_general(
                d1, d2,
                dimension_numbers=(((1,), (1,)), ((), ())),
                preferred_element_type=jnp.float32,
            )
        else:
            # Small-B path: transpose-free pairwise Gram on the VPU, one
            # broadcast-multiply-row-reduce per column j.  Lets T be sized from
            # the VMEM budget with no layout blow-up.
            cols = [
                jnp.sum(d1f * d2f[j:j + 1, :], axis=1, keepdims=True)   # (B, 1)
                for j in range(B)
            ]
            gram_acc[...] += jnp.concatenate(cols, axis=1)              # (B, B)

        @pl.when(k == pl.num_programs(0) - 1)
        def _():
            n1 = jnp.sqrt(n1_acc[...]) + 1e-6            # (B, 1)   |d1| + eps
            n2 = jnp.sqrt(n2_acc[...]) + 1e-6            # (B, 1)   |d2| + eps
            # (d1/(|d1|+eps)) . (d2/(|d2|+eps)) == (d1.d2) / ((|d1|+eps)(|d2|+eps))
            g = gram_acc[...] / (n1 * n2.T)              # (B, B)
            out_ref[0, 0] = jnp.sum(g * g) * (1.0 / float(B * B))

    return kernel


def diff_loss(D1, D2, *, tk=None, force_mxu=None):
    """D1, D2: arrays with a leading batch dim (e.g. NCHW). Returns scalar f32."""
    B = D1.shape[0]
    assert D2.shape[0] == B, "batch dims must match"
    d1 = D1.reshape(B, -1)
    d2 = D2.reshape(B, -1)
    assert d1.shape[1] == d2.shape[1], "flattened feature dims must match for mm"
    F = d1.shape[1]
    itemsize = jnp.dtype(d1.dtype).itemsize

    use_mxu = (B > _MXU_BATCH_THRESHOLD) if force_mxu is None else bool(force_mxu)

    vmem_cap = _vmem_capacity_bytes()
    if tk is None:
        # Per step the pipeline holds 2 inputs x 2 buffers x (B, T) tiles in the
        # native dtype plus a handful of f32 tile-sized temporaries; keep that
        # at ~half of physical VMEM (auto-adapts to v7x's 64 MiB).
        bytes_per_lane = B * (4 * itemsize + 24)
        T = (vmem_cap // 2) // bytes_per_lane
        T = min(T, 1 << 21)
        if use_mxu:
            T = min(T, _MXU_MAX_TK)
        T = max(T, 512)
    else:
        T = int(tk)

    if T >= F:
        T = F                                   # single full-width block (no lane constraint)
    else:
        T = max(128, (T // 128) * 128)          # multiple of 128 lanes
    kt = -(-F // T)                             # cdiv
    ragged = (F % T) != 0                       # last tile masked in-kernel (no HBM-side pad)

    # Input pipeline + tile temporaries + (MXU path) transposed RHS + scratch.
    vmem_need = B * T * (4 * itemsize + 24) + 4 * B * B + 16 * B + 4096
    if use_mxu:
        vmem_need += T * max(B, 128) * 4
    vmem_limit = int(min(max(vmem_need + (16 << 20), 32 << 20), vmem_cap - (2 << 20)))

    kernel = _make_kernel(B, T, F, ragged, use_mxu)

    cost = pl.CostEstimate(
        flops=2 * B * B * F + 4 * B * F,
        transcendentals=0,
        bytes_accessed=2 * B * F * itemsize + 4,
    )

    out = pl.pallas_call(
        kernel,
        out_shape=jax.ShapeDtypeStruct((1, 1), jnp.float32),
        grid_spec=pltpu.PrefetchScalarGridSpec(
            num_scalar_prefetch=0,
            grid=(kt,),
            in_specs=[
                pl.BlockSpec((B, T), lambda k: (0, k)),
                pl.BlockSpec((B, T), lambda k: (0, k)),
            ],
            out_specs=pl.BlockSpec(memory_space=pltpu.SMEM),
            scratch_shapes=[
                pltpu.VMEM((B, B), jnp.float32),   # raw Gram accumulator
                pltpu.VMEM((B, 1), jnp.float32),   # sum(d1^2) per row
                pltpu.VMEM((B, 1), jnp.float32),   # sum(d2^2) per row
            ],
        ),
        compiler_params=pltpu.CompilerParams(
            dimension_semantics=("arbitrary",),
            vmem_limit_bytes=vmem_limit,
        ),
        cost_estimate=cost,
    )(d1, d2)
    return out[0, 0]


def diff_loss_ref(D1, D2):
    """Pure-JAX reference (normalize-then-matmul, like the PyTorch module)."""
    B = D1.shape[0]
    d1 = D1.reshape(B, -1).astype(jnp.float32)
    d2 = D2.reshape(B, -1).astype(jnp.float32)
    n1 = jnp.linalg.norm(d1, axis=1, keepdims=True)
    n2 = jnp.linalg.norm(d2, axis=1, keepdims=True)
    d1n = d1 / (n1 + 1e-6)
    d2n = d2 / (n2 + 1e-6)
    g = d1n @ d2n.T
    return jnp.mean(g * g)


if __name__ == "__main__":
    key = jax.random.PRNGKey(0)
    k1, k2, k3, k4 = jax.random.split(key, 4)

    # Small NCHW inputs consistent with the module's view(B, -1) forward.
    B, C, H, W = 2, 4, 16, 16
    D1 = jax.random.normal(k1, (B, C, H, W), dtype=jnp.float32)
    D2 = jax.random.normal(k2, (B, C, H, W), dtype=jnp.float32)
    ref = jax.block_until_ready(diff_loss_ref(D1, D2))

    # 1) Default auto tile (single full-width block), small-B VPU Gram path.
    out = jax.block_until_ready(diff_loss(D1, D2))
    assert jnp.allclose(out, ref, rtol=1e-5, atol=1e-6), (out, ref)

    # 2) Forced small tile -> multi-step Gram / norm^2 accumulation path.
    out_t = jax.block_until_ready(diff_loss(D1, D2, tk=256))
    assert jnp.allclose(out_t, ref, rtol=1e-5, atol=1e-6), (out_t, ref)

    # 3) Forced MXU Gram path (used automatically for larger batches).
    out_m = jax.block_until_ready(diff_loss(D1, D2, tk=256, force_mxu=True))
    assert jnp.allclose(out_m, ref, rtol=1e-5, atol=1e-6), (out_m, ref)

    # 4) Ragged feature dim (F = 300, not a multiple of the 128-lane tile):
    #    exercises the in-kernel last-tile masking that replaced jnp.pad.
    E1 = jax.random.normal(k3, (2, 3, 10, 10), dtype=jnp.float32)
    E2 = jax.random.normal(k4, (2, 3, 10, 10), dtype=jnp.float32)
    ref_r = jax.block_until_ready(diff_loss_ref(E1, E2))
    out_r = jax.block_until_ready(diff_loss(E1, E2, tk=128))
    assert jnp.allclose(out_r, ref_r, rtol=1e-5, atol=1e-6), (out_r, ref_r)

    # 5) bf16 inputs (halves HBM traffic; accumulation stays f32).
    ref_b = jax.block_until_ready(
        diff_loss_ref(D1.astype(jnp.bfloat16), D2.astype(jnp.bfloat16)))
    out_b = jax.block_until_ready(
        diff_loss(D1.astype(jnp.bfloat16), D2.astype(jnp.bfloat16)))
    assert jnp.allclose(out_b, ref_b, rtol=1e-3, atol=1e-4), (out_b, ref_b)

    print("KERNEL_OK")
</pallas_src>

<mosaic_0001>
module attributes {stable_mosaic.version = 11 : i64} {
  func.func @kernel(%arg0: i32, %arg1: memref<2x1024xf32, #tpu.memory_space<vmem>>, %arg2: memref<2x1024xf32, #tpu.memory_space<vmem>>, %arg3: memref<1x1xf32, #tpu.memory_space<smem>>, %arg4: memref<2x2xf32, #tpu.memory_space<vmem>>, %arg5: memref<2x1xf32, #tpu.memory_space<vmem>>, %arg6: memref<2x1xf32, #tpu.memory_space<vmem>>) attributes {dimension_semantics = [#tpu.dimension_semantics<arbitrary>], iteration_bounds = array<i64: 1>, scalar_prefetch = 0 : i64, scratch_operands = 3 : i64, tpu.core_type = #tpu.core_type<tc>, window_params = [{transform_indices = @transform_0, window_bounds = array<i64: 2, 1024>}, {transform_indices = @transform_1, window_bounds = array<i64: 2, 1024>}, {transform_indices = @transform_2, window_bounds = array<i64: 1, 1>}]} {
    %c0_i32 = arith.constant 0 : i32
    %0 = arith.cmpi eq, %arg0, %c0_i32 : i32
    %1 = arith.extui %0 : i1 to i32
    %c0_i32_0 = arith.constant 0 : i32
    %2 = arith.cmpi ne, %1, %c0_i32_0 : i32
    scf.if %2 {
      %cst_21 = arith.constant 0.000000e+00 : f32
      %34 = vector.broadcast %cst_21 : f32 to vector<2x2xf32>
      %c0_22 = arith.constant 0 : index
      %c0_23 = arith.constant 0 : index
      %35 = vector.load %arg4[%c0_22, %c0_23] : memref<2x2xf32, #tpu.memory_space<vmem>>, vector<2x2xf32>
      tpu.vector_store %arg4[%c0_22, %c0_23], %34 {strides = array<i32>} : memref<2x2xf32, #tpu.memory_space<vmem>>, vector<2x2xf32>,
      %cst_24 = arith.constant 0.000000e+00 : f32
      %36 = vector.broadcast %cst_24 : f32 to vector<2x1xf32>
      %c0_25 = arith.constant 0 : index
      %c0_26 = arith.constant 0 : index
      %37 = vector.load %arg5[%c0_25, %c0_26] : memref<2x1xf32, #tpu.memory_space<vmem>>, vector<2x1xf32>
      tpu.vector_store %arg5[%c0_25, %c0_26], %36 {strides = array<i32>} : memref<2x1xf32, #tpu.memory_space<vmem>>, vector<2x1xf32>,
      %cst_27 = arith.constant 0.000000e+00 : f32
      %38 = vector.broadcast %cst_27 : f32 to vector<2x1xf32>
      %c0_28 = arith.constant 0 : index
      %c0_29 = arith.constant 0 : index
      %39 = vector.load %arg6[%c0_28, %c0_29] : memref<2x1xf32, #tpu.memory_space<vmem>>, vector<2x1xf32>
      tpu.vector_store %arg6[%c0_28, %c0_29], %38 {strides = array<i32>} : memref<2x1xf32, #tpu.memory_space<vmem>>, vector<2x1xf32>,
    } else {
    }
    %c0 = arith.constant 0 : index
    %c0_1 = arith.constant 0 : index
    %3 = vector.load %arg1[%c0, %c0_1] : memref<2x1024xf32, #tpu.memory_space<vmem>>, vector<2x1024xf32>
    %c0_2 = arith.constant 0 : index
    %c0_3 = arith.constant 0 : index
    %4 = vector.load %arg2[%c0_2, %c0_3] : memref<2x1024xf32, #tpu.memory_space<vmem>>, vector<2x1024xf32>
    %c0_4 = arith.constant 0 : index
    %c0_5 = arith.constant 0 : index
    %5 = vector.load %arg5[%c0_4, %c0_5] : memref<2x1xf32, #tpu.memory_space<vmem>>, vector<2x1xf32>
    %6 = arith.mulf %3, %3 : vector<2x1024xf32>
    %cst = arith.constant dense<0.000000e+00> : vector<2xf32>
    %7 = vector.multi_reduction <add>, %6, %cst [1] : vector<2x1024xf32> to vector<2xf32>
    %8 = vector.shape_cast %7 : vector<2xf32> to vector<2x1xf32>
    %9 = arith.addf %5, %8 : vector<2x1xf32>
    %c0_6 = arith.constant 0 : index
    %c0_7 = arith.constant 0 : index
    %10 = vector.load %arg5[%c0_6, %c0_7] : memref<2x1xf32, #tpu.memory_space<vmem>>, vector<2x1xf32>
    tpu.vector_store %arg5[%c0_6, %c0_7], %9 {strides = array<i32>} : memref<2x1xf32, #tpu.memory_space<vmem>>, vector<2x1xf32>,
    %c0_8 = arith.constant 0 : index
    %c0_9 = arith.constant 0 : index
    %11 = vector.load %arg6[%c0_8, %c0_9] : memref<2x1xf32, #tpu.memory_space<vmem>>, vector<2x1xf32>
    %12 = arith.mulf %4, %4 : vector<2x1024xf32>
    %cst_10 = arith.constant dense<0.000000e+00> : vector<2xf32>
    %13 = vector.multi_reduction <add>, %12, %cst_10 [1] : vector<2x1024xf32> to vector<2xf32>
    %14 = vector.shape_cast %13 : vector<2xf32> to vector<2x1xf32>
    %15 = arith.addf %11, %14 : vector<2x1xf32>
    %c0_11 = arith.constant 0 : index
    %c0_12 = arith.constant 0 : index
    %16 = vector.load %arg6[%c0_11, %c0_12] : memref<2x1xf32, #tpu.memory_space<vmem>>, vector<2x1xf32>
    tpu.vector_store %arg6[%c0_11, %c0_12], %15 {strides = array<i32>} : memref<2x1xf32, #tpu.memory_space<vmem>>, vector<2x1xf32>,
    %17 = vector.extract_strided_slice %4 {offsets = [0, 0], sizes = [1, 1024], strides = [1, 1]} : vector<2x1024xf32> to vector<1x1024xf32>
    %18 = vector.broadcast %17 : vector<1x1024xf32> to vector<2x1024xf32>
    %19 = arith.mulf %3, %18 : vector<2x1024xf32>
    %cst_13 = arith.constant dense<0.000000e+00> : vector<2xf32>
    %20 = vector.multi_reduction <add>, %19, %cst_13 [1] : vector<2x1024xf32> to vector<2xf32>
    %21 = vector.shape_cast %20 : vector<2xf32> to vector<2x1xf32>
    %22 = vector.extract_strided_slice %4 {offsets = [1, 0], sizes = [1, 1024], strides = [1, 1]} : vector<2x1024xf32> to vector<1x1024xf32>
    %23 = vector.broadcast %22 : vector<1x1024xf32> to vector<2x1024xf32>
    %24 = arith.mulf %3, %23 : vector<2x1024xf32>
    %cst_14 = arith.constant dense<0.000000e+00> : vector<2xf32>
    %25 = vector.multi_reduction <add>, %24, %cst_14 [1] : vector<2x1024xf32> to vector<2xf32>
    %26 = vector.shape_cast %25 : vector<2xf32> to vector<2x1xf32>
    %c0_15 = arith.constant 0 : index
    %c0_16 = arith.constant 0 : index
    %27 = vector.load %arg4[%c0_15, %c0_16] : memref<2x2xf32, #tpu.memory_space<vmem>>, vector<2x2xf32>
    %28 = tpu.concatenate %21, %26 in 1 : vector<2x1xf32>, vector<2x1xf32> -> vector<2x2xf32>
    %29 = arith.addf %27, %28 : vector<2x2xf32>
    %c0_17 = arith.constant 0 : index
    %c0_18 = arith.constant 0 : index
    %30 = vector.load %arg4[%c0_17, %c0_18] : memref<2x2xf32, #tpu.memory_space<vmem>>, vector<2x2xf32>
    tpu.vector_store %arg4[%c0_17, %c0_18], %29 {strides = array<i32>} : memref<2x2xf32, #tpu.memory_space<vmem>>, vector<2x2xf32>,
    %c0_i32_19 = arith.constant 0 : i32
    %31 = arith.cmpi eq, %arg0, %c0_i32_19 : i32
    %32 = arith.extui %31 : i1 to i32
    %c0_i32_20 = arith.constant 0 : i32
    %33 = arith.cmpi ne, %32, %c0_i32_20 : i32
    scf.if %33 {
      %c0_21 = arith.constant 0 : index
      %c0_22 = arith.constant 0 : index
      %34 = vector.load %arg5[%c0_21, %c0_22] : memref<2x1xf32, #tpu.memory_space<vmem>>, vector<2x1xf32>
      %35 = math.sqrt %34 : vector<2x1xf32>
      %cst_23 = arith.constant 9.99999997E-7 : f32
      %36 = vector.broadcast %cst_23 : f32 to vector<2x1xf32>
      %37 = arith.addf %35, %36 : vector<2x1xf32>
      %c0_24 = arith.constant 0 : index
      %c0_25 = arith.constant 0 : index
      %38 = vector.load %arg6[%c0_24, %c0_25] : memref<2x1xf32, #tpu.memory_space<vmem>>, vector<2x1xf32>
      %39 = math.sqrt %38 : vector<2x1xf32>
      %cst_26 = arith.constant 9.99999997E-7 : f32
      %40 = vector.broadcast %cst_26 : f32 to vector<2x1xf32>
      %41 = arith.addf %39, %40 : vector<2x1xf32>
      %c0_27 = arith.constant 0 : index
      %c0_28 = arith.constant 0 : index
      %42 = vector.load %arg4[%c0_27, %c0_28] : memref<2x2xf32, #tpu.memory_space<vmem>>, vector<2x2xf32>
      %43 = tpu.transpose %41, [1, 0] : vector<2x1xf32> -> vector<1x2xf32>
      %44 = vector.broadcast %37 : vector<2x1xf32> to vector<2x2xf32>
      %45 = vector.broadcast %43 : vector<1x2xf32> to vector<2x2xf32>
      %46 = arith.mulf %44, %45 : vector<2x2xf32>
      %47 = arith.divf %42, %46 : vector<2x2xf32>
      %48 = arith.mulf %47, %47 : vector<2x2xf32>
      %49 = vector.shape_cast %48 : vector<2x2xf32> to vector<1x2x2xf32>
      %cst_29 = arith.constant dense<0.000000e+00> : vector<1xf32>
      %50 = vector.multi_reduction <add>, %49, %cst_29 [1, 2] : vector<1x2x2xf32> to vector<1xf32>
      %51 = vector.shape_cast %50 : vector<1xf32> to vector<1x1x1xf32>
      %52 = vector.extract %51[0, 0, 0] : f32 from vector<1x1x1xf32>
      %cst_30 = arith.constant 2.500000e-01 : f32
      %53 = arith.mulf %52, %cst_30 : f32
      %c0_31 = arith.constant 0 : index
      %c0_32 = arith.constant 0 : index
      %54 = memref.load %arg3[%c0_31, %c0_32] : memref<1x1xf32, #tpu.memory_space<smem>>
      memref.store %53, %arg3[%c0_31, %c0_32] : memref<1x1xf32, #tpu.memory_space<smem>>
    } else {
    }
    return
  }
  func.func @transform_0(%arg0: i32) -> (i32, i32) {
    %c0_i32 = arith.constant 0 : i32
    %c0_i32_0 = arith.constant 0 : i32
    return %c0_i32, %arg0 : i32, i32
  }
  func.func @transform_1(%arg0: i32) -> (i32, i32) {
    %c0_i32 = arith.constant 0 : i32
    %c0_i32_0 = arith.constant 0 : i32
    return %c0_i32, %arg0 : i32, i32
  }
  func.func @transform_2(%arg0: i32) -> (i32, i32) {
    %c0_i32 = arith.constant 0 : i32
    %c0_i32_0 = arith.constant 0 : i32
    %c0_i32_1 = arith.constant 0 : i32
    return %c0_i32, %c0_i32_0 : i32, i32
  }
}

</mosaic_0001>

<llo_original>
// kernel: tpu_custom_call.1
$region0: #{tpu_custom_call.1}
  #allocation0 [shape = 'u32[]', space=smem, size = 0x4, offset = 0x4, fixed_abs, tag = 'smem constant byte address 0x4 - core index']
  #allocation1 [shape = 'u32[144,128]{1,0:T(1,128)}', space=vmem, size = 0x12000, scoped, tag = 'internal scratch']
  #allocation2 [shape = 'f32[2,2]{1,0:T(2,128)}', space=vmem, size = 0x400, scoped, tag = 'scratch operand']
  #allocation3 [shape = 'f32[2,1]{1,0:T(2,128)}', space=vmem, size = 0x400, scoped, tag = 'scratch operand']
  #allocation4 [shape = 'f32[2,1]{1,0:T(2,128)}', space=vmem, size = 0x400, scoped, tag = 'scratch operand']
  %s0 = inlined_call_operand.hbm [shape: f32[2,1024], index: 0, kind: input, shape index: {}]
  %s1 = inlined_call_operand.hbm [shape: f32[2,1024], index: 1, kind: input, shape index: {}]
  %s2 = inlined_call_operand.hbm [shape: f32[1,1], index: 2, kind: output, shape index: {}]
  %s3 = sld [smem:[#allocation0]]
  $region34: #{tpu_custom_call.1} parent=0
    _
  %s5 = ssub.s32 1, %s3
  %s6 = scalar_select 0, %s5, %s3
  $region1: #{tpu_custom_call.1} parent=0
    #allocation5 [shape = 'u8[8192]{0}', space=vmem, size = 0x2000, scoped, tag = 'input window, operand 0, single buffered']
    #allocation6 [shape = 's32[1]{0}', space=sflag, size = 0x4, scoped, tag = 'scoped memory for tpu_custom_call.1']
    #allocation7 [shape = 's32[1]{0}', space=sflag, size = 0x4, scoped, tag = 'scoped memory for tpu_custom_call.1']
    #allocation8 [shape = 'u8[8192]{0}', space=vmem, size = 0x2000, scoped, tag = 'input window, operand 1, single buffered']
    #allocation9 [shape = 's32[1]{0}', space=sflag, size = 0x4, scoped, tag = 'scoped memory for tpu_custom_call.1']
    #allocation10 [shape = 'u8[512]{0}', space=smem, size = 0x200, scoped, tag = 'output window, operand 0, single buffered']
    %7 = vsyncpa [#allocation6], 0
    %8 = vsyncpa [#allocation9], 0
    %9 = vsyncpa [#allocation7], 0
    // Predicated region
    $region2: #{tpu_custom_call.1} parent=1 // pred_check
      _
    $region3: #{tpu_custom_call.1} parent=1 // pred_check_branch
      %11 = sbr.rel (0) target = $region5
    $region4: #{tpu_custom_call.1} parent=1 // pred_region
      %s13 = ssub.s32 256, 256
      %14 = vsyncadd [#allocation6], %s13
      %s16 = sshll.u32 [#allocation5], 4
      %s17 = int_to_ptr.vmem [resolvable:$true] %s16
      %19 = dma.hbm_to_vmem [thread:$0]  %s0, 256, %s17, [#allocation6]
    $region5: #{tpu_custom_call.1} parent=1 // pred_fallthru
      _
    // Predicated region
    $region6: #{tpu_custom_call.1} parent=1 // pred_check
      _
    $region7: #{tpu_custom_call.1} parent=1 // pred_check_branch
      %21 = sbr.rel (0) target = $region9
    $region8: #{tpu_custom_call.1} parent=1 // pred_region
      %s23 = ssub.s32 256, 256
      %24 = vsyncadd [#allocation9], %s23
      %s26 = sshll.u32 [#allocation8], 4
      %s27 = int_to_ptr.vmem [resolvable:$true] %s26
      %29 = dma.hbm_to_vmem [thread:$0]  %s1, 256, %s27, [#allocation9]
    $region9: #{tpu_custom_call.1} parent=1 // pred_fallthru
      _
    // Predicated region
    $region10: #{tpu_custom_call.1} parent=1 // pred_check
      _
    $region11: #{tpu_custom_call.1} parent=1 // pred_check_branch
      %31 = sbr.rel (0) target = $region13
    $region12: #{tpu_custom_call.1} parent=1 // pred_region
      %32 = dma.done [#allocation6], 256
    $region13: #{tpu_custom_call.1} parent=1 // pred_fallthru
      _
    // Predicated region
    $region14: #{tpu_custom_call.1} parent=1 // pred_check
      _
    $region15: #{tpu_custom_call.1} parent=1 // pred_check_branch
      %34 = sbr.rel (0) target = $region17
    $region16: #{tpu_custom_call.1} parent=1 // pred_region
      %35 = dma.done [#allocation9], 256
    $region17: #{tpu_custom_call.1} parent=1 // pred_fallthru
      _
    %p36 = scmp.eq.s32.totalorder 0, 0
    // Predicated region
    $region18: #{tpu_custom_call.1} parent=1 // pred_check
      %p37 = pneg %p36
    $region19: #{tpu_custom_call.1} parent=1 // pred_check_branch
      %39 = sbr.rel (%p37) target = $region21
    $region20: #{tpu_custom_call.1} parent=1 // pred_region
      %vm40 = vcmask 9216
      %41 = vst.msk [vmem:[#allocation2] sm:$0x3] %vm40, 0.0
      %vm42 = vcmask 1024
      %43 = vst.msk [vmem:[#allocation3] sm:$0x3] %vm42, 0.0
      %44 = vst.msk [vmem:[#allocation4] sm:$0x3] %vm42, 0.0
    $region21: #{tpu_custom_call.1} parent=1 // pred_fallthru
      _
    %v45 = vld [vmem:[#allocation5] sm:$0xff]
    %v46 = vld [vmem:[#allocation5 + $0x8] sm:$0xff]
    %v47 = vld [vmem:[#allocation8] sm:$0xff]
    %v48 = vld [vmem:[#allocation8 + $0x8] sm:$0xff]
    %v49 = vld [vmem:[#allocation3] sm:$0x3]
    %v50 = vmul.f32 %v45, %v45
    %v51 = vmul.f32 %v46, %v46
    %v54 = vcombine.high %v50, %v50
    %v56 = vunpack.c.l.s4 1983009808
    %v57 = vunpack.c.0.s8 %v56
    %v58 = vlaneseq
    %v59 = vshrl.u32 %v58, 7
    %v60 = vsub.s32 %v57, %v59
    %v61 = vrot.slane %v50, %v60
    %v63 = vunpack.c.l.s4 1983009808
    %v64 = vunpack.c.0.s8 %v63
    %v65 = vlaneseq
    %v66 = vshrl.u32 %v65, 7
    %v67 = vsub.s32 %v64, %v66
    %v68 = vrot.slane %v54, %v67
    %v69 = vcombine.high %v61, %v61
    %v70 = vcombine.high %v68, %v68
    %v71 = vcombine.high %v51, %v51
    %v73 = vunpack.c.l.s4 1983009808
    %v74 = vunpack.c.0.s8 %v73
    %v75 = vlaneseq
    %v76 = vshrl.u32 %v75, 7
    %v77 = vsub.s32 %v74, %v76
    %v78 = vrot.slane %v51, %v77
    %v80 = vunpack.c.l.s4 1983009808
    %v81 = vunpack.c.0.s8 %v80
    %v82 = vlaneseq
    %v83 = vshrl.u32 %v82, 7
    %v84 = vsub.s32 %v81, %v83
    %v85 = vrot.slane %v71, %v84
    %v86 = vcombine.high %v78, %v78
    %v87 = vcombine.high %v85, %v85
    %vm96 = vcmask 1041408
    %v97 = vsel %vm96, %v61, 0.0
    %v98 = vsel %vm96, %v69, 0.0
    %v99 = vadd.f32 %v97, %v98
    %v100 = vsel %vm96, %v68, 0.0
    %v101 = vadd.f32 %v99, %v100
    %v102 = vsel %vm96, %v70, 0.0
    %v103 = vadd.f32 %v101, %v102
    %v104 = vsel %vm96, %v78, 0.0
    %v105 = vadd.f32 %v103, %v104
    %v106 = vsel %vm96, %v86, 0.0
    %v107 = vadd.f32 %v105, %v106
    %v108 = vsel %vm96, %v85, 0.0
    %v109 = vadd.f32 %v107, %v108
    %v110 = vsel %vm96, %v87, 0.0
    %v111 = vadd.f32 %v109, %v110
    %112 = vadd.xlane.f32.xlu0 %v111
    %v113 = vpop.xlane.xlu0 %112
    %v114 = vadd.f32 %v49, %v113
    %vm115 = vcmask 1024
    %116 = vst.msk [vmem:[#allocation3] sm:$0x3] %vm115, %v114
    %v117 = vld [vmem:[#allocation4] sm:$0x3]
    %v118 = vmul.f32 %v47, %v47
    %v119 = vmul.f32 %v48, %v48
    %v122 = vcombine.high %v118, %v118
    %v124 = vunpack.c.l.s4 1983009808
    %v125 = vunpack.c.0.s8 %v124
    %v126 = vlaneseq
    %v127 = vshrl.u32 %v126, 7
    %v128 = vsub.s32 %v125, %v127
    %v129 = vrot.slane %v118, %v128
    %v131 = vunpack.c.l.s4 1983009808
    %v132 = vunpack.c.0.s8 %v131
    %v133 = vlaneseq
    %v134 = vshrl.u32 %v133, 7
    %v135 = vsub.s32 %v132, %v134
    %v136 = vrot.slane %v122, %v135
    %v137 = vcombine.high %v129, %v129
    %v138 = vcombine.high %v136, %v136
    %v139 = vcombine.high %v119, %v119
    %v141 = vunpack.c.l.s4 1983009808
    %v142 = vunpack.c.0.s8 %v141
    %v143 = vlaneseq
    %v144 = vshrl.u32 %v143, 7
    %v145 = vsub.s32 %v142, %v144
    %v146 = vrot.slane %v119, %v145
    %v148 = vunpack.c.l.s4 1983009808
    %v149 = vunpack.c.0.s8 %v148
    %v150 = vlaneseq
    %v151 = vshrl.u32 %v150, 7
    %v152 = vsub.s32 %v149, %v151
    %v153 = vrot.slane %v139, %v152
    %v154 = vcombine.high %v146, %v146
    %v155 = vcombine.high %v153, %v153
    %v164 = vsel %vm96, %v129, 0.0
    %v165 = vsel %vm96, %v137, 0.0
    %v166 = vadd.f32 %v164, %v165
    %v167 = vsel %vm96, %v136, 0.0
    %v168 = vadd.f32 %v166, %v167
    %v169 = vsel %vm96, %v138, 0.0
    %v170 = vadd.f32 %v168, %v169
    %v171 = vsel %vm96, %v146, 0.0
    %v172 = vadd.f32 %v170, %v171
    %v173 = vsel %vm96, %v154, 0.0
    %v174 = vadd.f32 %v172, %v173
    %v175 = vsel %vm96, %v153, 0.0
    %v176 = vadd.f32 %v174, %v175
    %v177 = vsel %vm96, %v155, 0.0
    %v178 = vadd.f32 %v176, %v177
    %179 = vadd.xlane.f32.xlu0 %v178
    %v180 = vpop.xlane.xlu0 %179
    %v181 = vadd.f32 %v117, %v180
    %182 = vst.msk [vmem:[#allocation4] sm:$0x3] %vm115, %v181
    %v185 = vlaneseq
    %v186 = vshrl.u32 %v185, 7
    %v187 = vsub.s32 0, %v186
    %v188 = vrot.slane %v47, %v187
    %v189 = vlaneseq
    %v190 = vshrl.u32 %v189, 7
    %v191 = vsub.s32 2, %v190
    %v192 = vrot.slane %v47, %v191
    %v193 = vlaneseq
    %v194 = vshrl.u32 %v193, 7
    %v195 = vsub.s32 4, %v194
    %v196 = vrot.slane %v47, %v195
    %v197 = vlaneseq
    %v198 = vshrl.u32 %v197, 7
    %v199 = vsub.s32 6, %v198
    %v200 = vrot.slane %v47, %v199
    %v201 = vlaneseq
    %v202 = vshrl.u32 %v201, 7
    %v203 = vsub.s32 0, %v202
    %v204 = vrot.slane %v48, %v203
    %v205 = vlaneseq
    %v206 = vshrl.u32 %v205, 7
    %v207 = vsub.s32 2, %v206
    %v208 = vrot.slane %v48, %v207
    %v209 = vlaneseq
    %v210 = vshrl.u32 %v209, 7
    %v211 = vsub.s32 4, %v210
    %v212 = vrot.slane %v48, %v211
    %v213 = vlaneseq
    %v214 = vshrl.u32 %v213, 7
    %v215 = vsub.s32 6, %v214
    %v216 = vrot.slane %v48, %v215
    %v225 = vlaneseq
    %v226 = vshrl.u32 %v225, 7
    %v227 = vsub.s32 0, %v226
    %v228 = vrot.slane %v188, %v227
    %v229 = vlaneseq
    %v230 = vshrl.u32 %v229, 7
    %v231 = vsub.s32 0, %v230
    %v232 = vrot.slane %v192, %v231
    %v233 = vlaneseq
    %v234 = vshrl.u32 %v233, 7
    %v235 = vsub.s32 0, %v234
    %v236 = vrot.slane %v196, %v235
    %v237 = vlaneseq
    %v238 = vshrl.u32 %v237, 7
    %v239 = vsub.s32 0, %v238
    %v240 = vrot.slane %v200, %v239
    %v241 = vlaneseq
    %v242 = vshrl.u32 %v241, 7
    %v243 = vsub.s32 0, %v242
    %v244 = vrot.slane %v204, %v243
    %v245 = vlaneseq
    %v246 = vshrl.u32 %v245, 7
    %v247 = vsub.s32 0, %v246
    %v248 = vrot.slane %v208, %v247
    %v249 = vlaneseq
    %v250 = vshrl.u32 %v249, 7
    %v251 = vsub.s32 0, %v250
    %v252 = vrot.slane %v212, %v251
    %v253 = vlaneseq
    %v254 = vshrl.u32 %v253, 7
    %v255 = vsub.s32 0, %v254
    %v256 = vrot.slane %v216, %v255
    %v265 = vcombine.low %v228, %v232
    %v266 = vcombine.low %v236, %v240
    %v268 = vunpack.c.l.s4 1983009808
    %v269 = vunpack.c.0.s8 %v268
    %v270 = vlaneseq
    %v271 = vshrl.u32 %v270, 7
    %v272 = vsub.s32 %v269, %v271
    %v273 = vrot.slane %v265, %v272
    %v275 = vunpack.c.l.s4 1983009808
    %v276 = vunpack.c.0.s8 %v275
    %v277 = vlaneseq
    %v278 = vshrl.u32 %v277, 7
    %v279 = vsub.s32 %v276, %v278
    %v280 = vrot.slane %v266, %v279
    %v281 = vcombine.low %v273, %v280
    %v282 = vcombine.low %v244, %v248
    %v283 = vcombine.low %v252, %v256
    %v285 = vunpack.c.l.s4 1983009808
    %v286 = vunpack.c.0.s8 %v285
    %v287 = vlaneseq
    %v288 = vshrl.u32 %v287, 7
    %v289 = vsub.s32 %v286, %v288
    %v290 = vrot.slane %v282, %v289
    %v292 = vunpack.c.l.s4 1983009808
    %v293 = vunpack.c.0.s8 %v292
    %v294 = vlaneseq
    %v295 = vshrl.u32 %v294, 7
    %v296 = vsub.s32 %v293, %v295
    %v297 = vrot.slane %v283, %v296
    %v298 = vcombine.low %v290, %v297
    %v301 = vmul.f32 %v45, %v281
    %v302 = vmul.f32 %v46, %v298
    %v305 = vcombine.high %v301, %v301
    %v307 = vunpack.c.l.s4 1983009808
    %v308 = vunpack.c.0.s8 %v307
    %v309 = vlaneseq
    %v310 = vshrl.u32 %v309, 7
    %v311 = vsub.s32 %v308, %v310
    %v312 = vrot.slane %v301, %v311
    %v314 = vunpack.c.l.s4 1983009808
    %v315 = vunpack.c.0.s8 %v314
    %v316 = vlaneseq
    %v317 = vshrl.u32 %v316, 7
    %v318 = vsub.s32 %v315, %v317
    %v319 = vrot.slane %v305, %v318
    %v320 = vcombine.high %v312, %v312
    %v321 = vcombine.high %v319, %v319
    %v322 = vcombine.high %v302, %v302
    %v324 = vunpack.c.l.s4 1983009808
    %v325 = vunpack.c.0.s8 %v324
    %v326 = vlaneseq
    %v327 = vshrl.u32 %v326, 7
    %v328 = vsub.s32 %v325, %v327
    %v329 = vrot.slane %v302, %v328
    %v331 = vunpack.c.l.s4 1983009808
    %v332 = vunpack.c.0.s8 %v331
    %v333 = vlaneseq
    %v334 = vshrl.u32 %v333, 7
    %v335 = vsub.s32 %v332, %v334
    %v336 = vrot.slane %v322, %v335
    %v337 = vcombine.high %v329, %v329
    %v338 = vcombine.high %v336, %v336
    %v347 = vsel %vm96, %v312, 0.0
    %v348 = vsel %vm96, %v320, 0.0
    %v349 = vadd.f32 %v347, %v348
    %v350 = vsel %vm96, %v319, 0.0
    %v351 = vadd.f32 %v349, %v350
    %v352 = vsel %vm96, %v321, 0.0
    %v353 = vadd.f32 %v351, %v352
    %v354 = vsel %vm96, %v329, 0.0
    %v355 = vadd.f32 %v353, %v354
    %v356 = vsel %vm96, %v337, 0.0
    %v357 = vadd.f32 %v355, %v356
    %v358 = vsel %vm96, %v336, 0.0
    %v359 = vadd.f32 %v357, %v358
    %v360 = vsel %vm96, %v338, 0.0
    %v361 = vadd.f32 %v359, %v360
    %362 = vadd.xlane.f32.xlu0 %v361
    %v363 = vpop.xlane.xlu0 %362
    %v364 = vlaneseq
    %v365 = vshrl.u32 %v364, 7
    %v366 = vsub.s32 1, %v365
    %v367 = vrot.slane %v47, %v366
    %v368 = vlaneseq
    %v369 = vshrl.u32 %v368, 7
    %v370 = vsub.s32 3, %v369
    %v371 = vrot.slane %v47, %v370
    %v372 = vlaneseq
    %v373 = vshrl.u32 %v372, 7
    %v374 = vsub.s32 5, %v373
    %v375 = vrot.slane %v47, %v374
    %v376 = vlaneseq
    %v377 = vshrl.u32 %v376, 7
    %v378 = vsub.s32 7, %v377
    %v379 = vrot.slane %v47, %v378
    %v380 = vlaneseq
    %v381 = vshrl.u32 %v380, 7
    %v382 = vsub.s32 1, %v381
    %v383 = vrot.slane %v48, %v382
    %v384 = vlaneseq
    %v385 = vshrl.u32 %v384, 7
    %v386 = vsub.s32 3, %v385
    %v387 = vrot.slane %v48, %v386
    %v388 = vlaneseq
    %v389 = vshrl.u32 %v388, 7
    %v390 = vsub.s32 5, %v389
    %v391 = vrot.slane %v48, %v390
    %v392 = vlaneseq
    %v393 = vshrl.u32 %v392, 7
    %v394 = vsub.s32 7, %v393
    %v395 = vrot.slane %v48, %v394
    %v404 = vlaneseq
    %v405 = vshrl.u32 %v404, 7
    %v406 = vsub.s32 1, %v405
    %v407 = vrot.slane %v367, %v406
    %v408 = vlaneseq
    %v409 = vshrl.u32 %v408, 7
    %v410 = vsub.s32 1, %v409
    %v411 = vrot.slane %v371, %v410
    %v412 = vlaneseq
    %v413 = vshrl.u32 %v412, 7
    %v414 = vsub.s32 1, %v413
    %v415 = vrot.slane %v375, %v414
    %v416 = vlaneseq
    %v417 = vshrl.u32 %v416, 7
    %v418 = vsub.s32 1, %v417
    %v419 = vrot.slane %v379, %v418
    %v420 = vlaneseq
    %v421 = vshrl.u32 %v420, 7
    %v422 = vsub.s32 1, %v421
    %v423 = vrot.slane %v383, %v422
    %v424 = vlaneseq
    %v425 = vshrl.u32 %v424, 7
    %v426 = vsub.s32 1, %v425
    %v427 = vrot.slane %v387, %v426
    %v428 = vlaneseq
    %v429 = vshrl.u32 %v428, 7
    %v430 = vsub.s32 1, %v429
    %v431 = vrot.slane %v391, %v430
    %v432 = vlaneseq
    %v433 = vshrl.u32 %v432, 7
    %v434 = vsub.s32 1, %v433
    %v435 = vrot.slane %v395, %v434
    %v444 = vcombine.low %v407, %v411
    %v445 = vcombine.low %v415, %v419
    %v447 = vunpack.c.l.s4 1983009808
    %v448 = vunpack.c.0.s8 %v447
    %v449 = vlaneseq
    %v450 = vshrl.u32 %v449, 7
    %v451 = vsub.s32 %v448, %v450
    %v452 = vrot.slane %v444, %v451
    %v454 = vunpack.c.l.s4 1983009808
    %v455 = vunpack.c.0.s8 %v454
    %v456 = vlaneseq
    %v457 = vshrl.u32 %v456, 7
    %v458 = vsub.s32 %v455, %v457
    %v459 = vrot.slane %v445, %v458
    %v460 = vcombine.low %v452, %v459
    %v461 = vcombine.low %v423, %v427
    %v462 = vcombine.low %v431, %v435
    %v464 = vunpack.c.l.s4 1983009808
    %v465 = vunpack.c.0.s8 %v464
    %v466 = vlaneseq
    %v467 = vshrl.u32 %v466, 7
    %v468 = vsub.s32 %v465, %v467
    %v469 = vrot.slane %v461, %v468
    %v471 = vunpack.c.l.s4 1983009808
    %v472 = vunpack.c.0.s8 %v471
    %v473 = vlaneseq
    %v474 = vshrl.u32 %v473, 7
    %v475 = vsub.s32 %v472, %v474
    %v476 = vrot.slane %v462, %v475
    %v477 = vcombine.low %v469, %v476
    %v480 = vmul.f32 %v45, %v460
    %v481 = vmul.f32 %v46, %v477
    %v484 = vcombine.high %v480, %v480
    %v486 = vunpack.c.l.s4 1983009808
    %v487 = vunpack.c.0.s8 %v486
    %v488 = vlaneseq
    %v489 = vshrl.u32 %v488, 7
    %v490 = vsub.s32 %v487, %v489
    %v491 = vrot.slane %v480, %v490
    %v493 = vunpack.c.l.s4 1983009808
    %v494 = vunpack.c.0.s8 %v493
    %v495 = vlaneseq
    %v496 = vshrl.u32 %v495, 7
    %v497 = vsub.s32 %v494, %v496
    %v498 = vrot.slane %v484, %v497
    %v499 = vcombine.high %v491, %v491
    %v500 = vcombine.high %v498, %v498
    %v501 = vcombine.high %v481, %v481
    %v503 = vunpack.c.l.s4 1983009808
    %v504 = vunpack.c.0.s8 %v503
    %v505 = vlaneseq
    %v506 = vshrl.u32 %v505, 7
    %v507 = vsub.s32 %v504, %v506
    %v508 = vrot.slane %v481, %v507
    %v510 = vunpack.c.l.s4 1983009808
    %v511 = vunpack.c.0.s8 %v510
    %v512 = vlaneseq
    %v513 = vshrl.u32 %v512, 7
    %v514 = vsub.s32 %v511, %v513
    %v515 = vrot.slane %v501, %v514
    %v516 = vcombine.high %v508, %v508
    %v517 = vcombine.high %v515, %v515
    %v526 = vsel %vm96, %v491, 0.0
    %v527 = vsel %vm96, %v499, 0.0
    %v528 = vadd.f32 %v526, %v527
    %v529 = vsel %vm96, %v498, 0.0
    %v530 = vadd.f32 %v528, %v529
    %v531 = vsel %vm96, %v500, 0.0
    %v532 = vadd.f32 %v530, %v531
    %v533 = vsel %vm96, %v508, 0.0
    %v534 = vadd.f32 %v532, %v533
    %v535 = vsel %vm96, %v516, 0.0
    %v536 = vadd.f32 %v534, %v535
    %v537 = vsel %vm96, %v515, 0.0
    %v538 = vadd.f32 %v536, %v537
    %v539 = vsel %vm96, %v517, 0.0
    %v540 = vadd.f32 %v538, %v539
    %541 = vadd.xlane.f32.xlu0 %v540
    %v542 = vpop.xlane.xlu0 %541
    %v543 = vld [vmem:[#allocation2] sm:$0x3]
    %vm544 = vcmask 7168
    %v545 = vsel %vm544, %v363, %v542
    %v546 = vadd.f32 %v543, %v545
    %vm547 = vcmask 9216
    %548 = vst.msk [vmem:[#allocation2] sm:$0x3] %vm547, %v546
    // Predicated region
    $region22: #{tpu_custom_call.1} parent=1 // pred_check
      %p549 = pneg %p36
    $region23: #{tpu_custom_call.1} parent=1 // pred_check_branch
      %551 = sbr.rel (%p549) target = $region25
    $region24: #{tpu_custom_call.1} parent=1 // pred_region
      %v552 = vld [vmem:[#allocation3] sm:$0x3]
      %v553 = vrsqrt.pop %v552
      %v554 = vmul.f32 %v552, %v553
      %vm555 = vcmp.eq.f32.partialorder %v552, inf
      %v556 = vsel %vm555, %v552, %v554
      %vm557 = vcmp.eq.f32.partialorder %v552, 0.0
      %v558 = vand.u32 %v552, 2147483648
      %v559 = vsel %vm557, %v558, %v556
      %v560 = vadd.f32 %v559, 1e-06
      %v561 = vld [vmem:[#allocation4] sm:$0x3]
      %v562 = vrsqrt.pop %v561
      %v563 = vmul.f32 %v561, %v562
      %vm564 = vcmp.eq.f32.partialorder %v561, inf
      %v565 = vsel %vm564, %v561, %v563
      %vm566 = vcmp.eq.f32.partialorder %v561, 0.0
      %v567 = vand.u32 %v561, 2147483648
      %v568 = vsel %vm566, %v567, %v565
      %v569 = vadd.f32 %v568, 1e-06
      %v570 = vld [vmem:[#allocation2] sm:$0x3]
      %571 = vxpose.xlu0.b32.start [1/16] %v569, 128
      %572 = vxpose.xlu0.b32.cont [2/16] 0.0, 128
      %573 = vxpose.xlu0.b32.cont [3/16] 0.0, 128
      %574 = vxpose.xlu0.b32.cont [4/16] 0.0, 128
      %575 = vxpose.xlu0.b32.cont [5/16] 0.0, 128
      %576 = vxpose.xlu0.b32.cont [6/16] 0.0, 128
      %577 = vxpose.xlu0.b32.cont [7/16] 0.0, 128
      %578 = vxpose.xlu0.b32.cont [8/16] 0.0, 128
      %579 = vxpose.xlu0.b32.cont [9/16] 0.0, 128
      %580 = vxpose.xlu0.b32.cont [10/16] 0.0, 128
      %581 = vxpose.xlu0.b32.cont [11/16] 0.0, 128
      %582 = vxpose.xlu0.b32.cont [12/16] 0.0, 128
      %583 = vxpose.xlu0.b32.cont [13/16] 0.0, 128
      %584 = vxpose.xlu0.b32.cont [14/16] 0.0, 128
      %585 = vxpose.xlu0.b32.cont [15/16] 0.0, 128
      %586 = vxpose.xlu0.b32.end [16/16] 0.0, 128
      %v587 = vpop.trf.xlu0
      %v588 = vpop.trf.xlu0
      %v589 = vpop.trf.xlu0
      %v590 = vpop.trf.xlu0
      %v591 = vpop.trf.xlu0
      %v592 = vpop.trf.xlu0
      %v593 = vpop.trf.xlu0
      %v594 = vpop.trf.xlu0
      %v595 = vpop.trf.xlu0
      %v596 = vpop.trf.xlu0
      %v597 = vpop.trf.xlu0
      %v598 = vpop.trf.xlu0
      %v599 = vpop.trf.xlu0
      %v600 = vpop.trf.xlu0
      %v601 = vpop.trf.xlu0
      %v602 = vpop.trf.xlu0
      %604 = vset.pattern.permute.xlu0 0
      %605 = vperm.xlu0 %604, %v560
      %v606 = vpop.permute.xlu0 %605
      %v608 = vlaneseq
      %v609 = vshrl.u32 %v608, 7
      %v610 = vsub.s32 0, %v609
      %v611 = vrot.slane %v587, %v610
      %v612 = vmul.f32 %v606, %v611
      %v613 = vrcp.pop %v612
      %v614 = vmul.f32 %v570, %v613
      %v615 = vmul.f32 %v614, %v614
      %v616 = vsel %vm547, %v615, 0.0
      %617 = vadd.xlane.f32.xlu0 %v616
      %v618 = vpop.xlane.xlu0 %617
      %v619 = vrot.slane %v618, 4
      %v620 = vadd.f32 %v618, %v619
      %v621 = vrot.slane %v620, 2
      %v622 = vadd.f32 %v620, %v621
      %v623 = vrot.slane %v622, 1
      %v624 = vadd.f32 %v622, %v623
      %s625 = vtos %v624
      %s626 = smul.f32 %s625, 0.25
      %s627 = scalar_lea.smem [#allocation10], 0
      %628 = sst [smem:[%s627]] %s626
    $region25: #{tpu_custom_call.1} parent=1 // pred_fallthru
      _
    // Predicated region
    $region26: #{tpu_custom_call.1} parent=1 // pred_check
      _
    $region27: #{tpu_custom_call.1} parent=1 // pred_check_branch
      %630 = sbr.rel (0) target = $region29
    $region28: #{tpu_custom_call.1} parent=1 // pred_region
      %s632 = ssub.s32 16, 16
      %633 = vsyncadd [#allocation7], %s632
      %636 = dma.smem_to_hbm [#allocation10], 16, %s2, [#allocation7]
    $region29: #{tpu_custom_call.1} parent=1 // pred_fallthru
      _
    // Predicated region
    $region30: #{tpu_custom_call.1} parent=1 // pred_check
      _
    $region31: #{tpu_custom_call.1} parent=1 // pred_check_branch
      %638 = sbr.rel (0) target = $region33
    $region32: #{tpu_custom_call.1} parent=1 // pred_region
      %639 = dma.done [#allocation7], 16
    $region33: #{tpu_custom_call.1} parent=1 // pred_fallthru
      _
    %640 = sfence
    %641 = vsyncpa [#allocation6], 1
    %642 = vsyncpa [#allocation9], 1
    %643 = vsyncpa [#allocation7], 1

</llo_original>
